<compile_context>
chip_gen: v7x
topology: tpu7x:2x2x1
jax: 0.10.0
libtpu: 0.0.40
codegen_flags: <defaults>
</compile_context>

<pallas_src>
import jax
import jax.numpy as jnp
import numpy as np
from jax.experimental import pallas as pl
from jax.experimental.pallas import tpu as pltpu


def _round_up(x, m):
    return (x + m - 1) // m * m


# ---------------------------------------------------------------------------
# Fused kernel: embedding gather + conv1 + ReLU + conv2 + ReLU + max-pool
#               + linear + sigmoid — all in one pallas_call.
# ---------------------------------------------------------------------------
def _make_fused_kernel(B, L, VOCABP, E, K1, C1, K2, C2):
    L1 = L - K1 + 1           # conv1: padding = 0
    L2 = (L1 + 2) - K2 + 1    # conv2: padding = 1  (== L1 for K2 == 3)
    BL = B * L

    # The mask-as-padding trick below needs at least one masked row per batch
    # (serves as conv2's zero pad) and conv2 tap offsets in {-1, 0, +1}.
    assert K1 >= 2 and K2 == 3 and L1 >= 1 and L2 >= 1

    def kernel(ids_ref, emb_ref, w1_ref, b1_ref, w2_ref, b2_ref,
               wl_ref, bl_ref, out_ref):
        f32 = jnp.float32

        # ---- Embedding gather as an exact one-hot matmul on the MXU -------
        # ids_ref: (B*L, 1) int32.  onehot (B*L, VOCABP) @ emb (VOCABP, E).
        # VOCABP is padded to a sublane multiple so the contraction is aligned.
        iota_v = jax.lax.broadcasted_iota(jnp.int32, (BL, VOCABP), 1)
        onehot = (iota_v == ids_ref[...]).astype(f32)
        x = jnp.dot(onehot, emb_ref[...], preferred_element_type=f32)  # (BL, E)

        # Position of each slab row inside its batch element.
        t = jax.lax.broadcasted_iota(jnp.int32, (BL, 1), 0) % L

        # ---- Conv1d #1 (pad=0) + ReLU: K shifted matmuls on the 16-row slab
        # h1[r] = sum_k x[r+k] @ w1[k].  Shifts are sublane rolls of the slab
        # (jnp.roll with static shift -> two aligned sublane slices + concat
        # along the sublane axis; no lane-axis concat, no ragged reshape).
        # Rows with t >= L1 wrap across the batch boundary: they are masked
        # to zero, which also makes them the zero padding conv2 needs.
        acc1 = jnp.zeros((BL, C1), f32)
        for k in range(K1):
            xk = x if k == 0 else jnp.roll(x, shift=-k, axis=0)   # xk[r] = x[r+k]
            acc1 = acc1 + jnp.dot(xk, w1_ref[pl.ds(k * E, E), :],
                                  preferred_element_type=f32)
        mask1 = (t < L1).astype(f32)
        h1 = jnp.maximum(acc1 + b1_ref[...], 0.0) * mask1          # (BL, C1)

        # ---- Conv1d #2 (pad=1) + ReLU: shifted matmuls on the same slab ----
        # h2[r] = w2[0]·h1[r-1] + w2[1]·h1[r] + w2[2]·h1[r+1]; the zero-masked
        # rows of h1 at each batch edge supply the pad=1 zeros (wraparound of
        # the roll only ever lands on masked rows).
        acc2 = jnp.zeros((BL, C2), f32)
        for k in range(K2):
            off = k - 1                                            # pad = 1
            hk = h1 if off == 0 else jnp.roll(h1, shift=-off, axis=0)
            acc2 = acc2 + jnp.dot(hk, w2_ref[pl.ds(k * C1, C1), :],
                                  preferred_element_type=f32)
        mask2 = (t < L2).astype(f32)
        h2 = jnp.maximum(acc2 + b2_ref[...], 0.0) * mask2          # (BL, C2)

        # ---- max over time -> linear head -> sigmoid -----------------------
        # Masked rows are 0 and ReLU output >= 0, so they never win the max.
        pooled = jnp.max(h2.reshape(B, L, C2), axis=1)             # (B, C2)
        logits = jnp.dot(pooled, wl_ref[...],
                         preferred_element_type=f32) + bl_ref[0]   # SMEM scalar
        out_ref[...] = jax.nn.sigmoid(logits)                      # (B, 1)

    return kernel


# ---------------------------------------------------------------------------
# Wrapper: pads vocab, flattens weights, and calls the fused Pallas kernel
# with explicit memory-space BlockSpecs.
# ---------------------------------------------------------------------------
@jax.jit
def forward(ids, emb, w1, b1, w2, b2, wl, bl):
    B, L = ids.shape
    VOCAB, E = emb.shape
    K1, _, C1 = w1.shape
    K2, _, C2 = w2.shape

    VOCABP = _round_up(VOCAB, 64)    # aligned contraction for the gather matmul

    kernel = _make_fused_kernel(B, L, VOCABP, E, K1, C1, K2, C2)

    ids2 = ids.reshape(B * L, 1).astype(jnp.int32)   # lane-1 column of indices
    emb_p = jnp.zeros((VOCABP, E), jnp.float32).at[:VOCAB, :].set(emb)
    w1f = w1.reshape(K1 * E, C1)                     # taps stacked along rows
    w2f = w2.reshape(K2 * C1, C2)
    b1f = b1.reshape(1, C1)
    b2f = b2.reshape(1, C2)
    bl1 = bl.reshape(1)                              # scalar bias -> SMEM

    vmem = pl.BlockSpec(memory_space=pltpu.MemorySpace.VMEM)
    smem = pl.BlockSpec(memory_space=pltpu.MemorySpace.SMEM)

    out = pl.pallas_call(
        kernel,
        out_shape=jax.ShapeDtypeStruct((B, 1), jnp.float32),
        in_specs=[
            vmem,   # ids   (B*L, 1) int32
            vmem,   # emb   (VOCABP, E)
            vmem,   # w1f   (K1*E, C1)
            vmem,   # b1    (1, C1)   -- lane vector, must stay in VMEM
            vmem,   # w2f   (K2*C1, C2)
            vmem,   # b2    (1, C2)
            vmem,   # wl    (C2, 1)
            smem,   # bl    (1,)      -- true scalar, SMEM
        ],
        out_specs=vmem,
    )(ids2, emb_p, w1f, b1f, w2f, b2f, wl, bl1)
    return out[:, 0]                                 # squeeze -> (B,)


# ---------------------------------------------------------------------------
# Pure-JAX reference (same math, no Pallas) for a correctness check
# ---------------------------------------------------------------------------
def ref_forward(ids, emb, w1, b1, w2, b2, wl, bl):
    x = emb[ids]
    K1 = w1.shape[0]
    L1 = x.shape[1] - K1 + 1
    h1 = sum(jnp.einsum('ble,ec->blc', x[:, k:k + L1], w1[k]) for k in range(K1))
    h1 = jax.nn.relu(h1 + b1)
    h1p = jnp.pad(h1, ((0, 0), (1, 1), (0, 0)))
    K2 = w2.shape[0]
    L2 = h1p.shape[1] - K2 + 1
    h2 = sum(jnp.einsum('blc,cd->bld', h1p[:, k:k + L2], w2[k]) for k in range(K2))
    h2 = jax.nn.relu(h2 + b2)
    pooled = jnp.max(h2, axis=1)
    return jax.nn.sigmoid(pooled @ wl + bl)[:, 0]


if __name__ == "__main__":
    # net_param (synthetic, small):
    #   emb_size = [50, 32], cnn = [[32, 3], [32, 3]], dense = 32
    VOCAB, E = 50, 32
    C1, K1 = 32, 3
    C2, K2 = 32, 3
    DENSE = C2
    B, L = 2, 8

    key = jax.random.PRNGKey(0)
    k_emb, k_w1, k_b1, k_w2, k_b2, k_wl, k_ids = jax.random.split(key, 7)

    # Deterministic synthetic init mirroring init_weights_normal():
    #   embedding ~ N(0, 0.02); conv weights kaiming-normal; linear ~ N(0, 0.02), bias 0.
    emb = 0.02 * jax.random.normal(k_emb, (VOCAB, E), jnp.float32)
    w1 = jax.random.normal(k_w1, (K1, E, C1), jnp.float32) * jnp.sqrt(2.0 / (E * K1))
    b1 = 0.02 * jax.random.normal(k_b1, (1, 1, C1), jnp.float32)
    w2 = jax.random.normal(k_w2, (K2, C1, C2), jnp.float32) * jnp.sqrt(2.0 / (C1 * K2))
    b2 = 0.02 * jax.random.normal(k_b2, (1, 1, C2), jnp.float32)
    wl = 0.02 * jax.random.normal(k_wl, (DENSE, 1), jnp.float32)
    bl = jnp.zeros((1, 1), jnp.float32)

    ids = jax.random.randint(k_ids, (B, L), 0, VOCAB, dtype=jnp.int32)

    pred = forward(ids, emb, w1, b1, w2, b2, wl, bl)
    pred = jax.block_until_ready(pred)

    ref = ref_forward(ids, emb, w1, b1, w2, b2, wl, bl)
    assert pred.shape == (B,)
    np.testing.assert_allclose(np.asarray(pred), np.asarray(ref), rtol=1e-5, atol=1e-5)

    print("KERNEL_OK")
</pallas_src>

<mosaic_0001>
module attributes {stable_mosaic.version = 11 : i64} {
  func.func @kernel(%arg0: memref<16x1xi32, #tpu.memory_space<vmem>>, %arg1: memref<64x32xf32, #tpu.memory_space<vmem>>, %arg2: memref<96x32xf32, #tpu.memory_space<vmem>>, %arg3: memref<1x32xf32, #tpu.memory_space<vmem>>, %arg4: memref<96x32xf32, #tpu.memory_space<vmem>>, %arg5: memref<1x32xf32, #tpu.memory_space<vmem>>, %arg6: memref<32x1xf32, #tpu.memory_space<vmem>>, %arg7: memref<1xf32, #tpu.memory_space<smem>>, %arg8: memref<2x1xf32, #tpu.memory_space<vmem>>) attributes {dimension_semantics = [], scalar_prefetch = 0 : i64, scratch_operands = 0 : i64, tpu.core_type = #tpu.core_type<tc>} {
    %0 = tpu.iota {dimensions = array<i32: 1>} : vector<16x64xi32>
    %c0 = arith.constant 0 : index
    %c0_0 = arith.constant 0 : index
    %1 = vector.load %arg0[%c0, %c0_0] : memref<16x1xi32, #tpu.memory_space<vmem>>, vector<16x1xi32>
    %2 = vector.broadcast %1 : vector<16x1xi32> to vector<16x64xi32>
    %3 = arith.cmpi eq, %0, %2 : vector<16x64xi32>
    %4 = arith.extui %3 : vector<16x64xi1> to vector<16x64xi32>
    %5 = arith.sitofp %4 : vector<16x64xi32> to vector<16x64xf32>
    %c0_1 = arith.constant 0 : index
    %c0_2 = arith.constant 0 : index
    %6 = vector.load %arg1[%c0_1, %c0_2] : memref<64x32xf32, #tpu.memory_space<vmem>>, vector<64x32xf32>
    %cst = arith.constant dense<0.000000e+00> : vector<16x32xf32>
    %7 = tpu.matmul %5, %6, %cst {dimension_numbers = #tpu.dot_dimension_numbers<[1], [0], [0], [1], [0, 0, 1, 1], [], []>} : vector<16x64xf32>, vector<64x32xf32>, vector<16x32xf32> -> vector<16x32xf32>
    %8 = tpu.iota {dimensions = array<i32: 0>} : vector<16x1xi32>
    %c8_i32 = arith.constant 8 : i32
    %c0_i32 = arith.constant 0 : i32
    %9 = arith.cmpi eq, %c8_i32, %c0_i32 : i32
    %c1_i32 = arith.constant 1 : i32
    %10 = arith.select %9, %c1_i32, %c8_i32 : i32
    %11 = vector.broadcast %10 : i32 to vector<16x1xi32>
    %12 = arith.remsi %8, %11 : vector<16x1xi32>
    %c0_i32_3 = arith.constant 0 : i32
    %13 = vector.broadcast %c0_i32_3 : i32 to vector<16x1xi32>
    %14 = arith.cmpi ne, %12, %13 : vector<16x1xi32>
    %c0_i32_4 = arith.constant 0 : i32
    %15 = vector.broadcast %c0_i32_4 : i32 to vector<16x1xi32>
    %16 = arith.cmpi slt, %12, %15 : vector<16x1xi32>
    %c0_i32_5 = arith.constant 0 : i32
    %17 = arith.cmpi slt, %10, %c0_i32_5 : i32
    %18 = vector.broadcast %17 : i1 to vector<16x1xi1>
    %19 = vector.broadcast %18 : vector<16x1xi1> to vector<16x1xi1>
    %20 = arith.xori %16, %19 : vector<16x1xi1>
    %21 = arith.andi %20, %14 : vector<16x1xi1>
    %22 = vector.broadcast %10 : i32 to vector<16x1xi32>
    %23 = arith.addi %12, %22 : vector<16x1xi32>
    %24 = arith.select %21, %23, %12 : vector<16x1xi1>, vector<16x1xi32>
    %cst_6 = arith.constant 0.000000e+00 : f32
    %25 = vector.broadcast %cst_6 : f32 to vector<16x32xf32>
    %c0_7 = arith.constant 0 : index
    %c0_8 = arith.constant 0 : index
    %26 = vector.load %arg2[%c0_7, %c0_8] : memref<96x32xf32, #tpu.memory_space<vmem>>, vector<32x32xf32>
    %cst_9 = arith.constant dense<0.000000e+00> : vector<16x32xf32>
    %27 = tpu.matmul %7, %26, %cst_9 {dimension_numbers = #tpu.dot_dimension_numbers<[1], [0], [0], [1], [0, 0, 1, 1], [], []>} : vector<16x32xf32>, vector<32x32xf32>, vector<16x32xf32> -> vector<16x32xf32>
    %28 = arith.addf %25, %27 : vector<16x32xf32>
    %29 = vector.extract_strided_slice %7 {offsets = [1, 0], sizes = [15, 32], strides = [1, 1]} : vector<16x32xf32> to vector<15x32xf32>
    %30 = vector.extract_strided_slice %7 {offsets = [0, 0], sizes = [1, 32], strides = [1, 1]} : vector<16x32xf32> to vector<1x32xf32>
    %31 = tpu.concatenate %29, %30 in 0 : vector<15x32xf32>, vector<1x32xf32> -> vector<16x32xf32>
    %c32 = arith.constant 32 : index
    %c0_10 = arith.constant 0 : index
    %32 = vector.load %arg2[%c32, %c0_10] : memref<96x32xf32, #tpu.memory_space<vmem>>, vector<32x32xf32>
    %cst_11 = arith.constant dense<0.000000e+00> : vector<16x32xf32>
    %33 = tpu.matmul %31, %32, %cst_11 {dimension_numbers = #tpu.dot_dimension_numbers<[1], [0], [0], [1], [0, 0, 1, 1], [], []>} : vector<16x32xf32>, vector<32x32xf32>, vector<16x32xf32> -> vector<16x32xf32>
    %34 = arith.addf %28, %33 : vector<16x32xf32>
    %35 = vector.extract_strided_slice %7 {offsets = [2, 0], sizes = [14, 32], strides = [1, 1]} : vector<16x32xf32> to vector<14x32xf32>
    %36 = vector.extract_strided_slice %7 {offsets = [0, 0], sizes = [2, 32], strides = [1, 1]} : vector<16x32xf32> to vector<2x32xf32>
    %37 = tpu.concatenate %35, %36 in 0 : vector<14x32xf32>, vector<2x32xf32> -> vector<16x32xf32>
    %c64 = arith.constant 64 : index
    %c0_12 = arith.constant 0 : index
    %38 = vector.load %arg2[%c64, %c0_12] : memref<96x32xf32, #tpu.memory_space<vmem>>, vector<32x32xf32>
    %cst_13 = arith.constant dense<0.000000e+00> : vector<16x32xf32>
    %39 = tpu.matmul %37, %38, %cst_13 {dimension_numbers = #tpu.dot_dimension_numbers<[1], [0], [0], [1], [0, 0, 1, 1], [], []>} : vector<16x32xf32>, vector<32x32xf32>, vector<16x32xf32> -> vector<16x32xf32>
    %40 = arith.addf %34, %39 : vector<16x32xf32>
    %c6_i32 = arith.constant 6 : i32
    %41 = vector.broadcast %c6_i32 : i32 to vector<16x1xi32>
    %42 = arith.cmpi slt, %24, %41 : vector<16x1xi32>
    %43 = arith.extui %42 : vector<16x1xi1> to vector<16x1xi32>
    %44 = arith.sitofp %43 : vector<16x1xi32> to vector<16x1xf32>
    %c0_14 = arith.constant 0 : index
    %c0_15 = arith.constant 0 : index
    %45 = vector.load %arg3[%c0_14, %c0_15] : memref<1x32xf32, #tpu.memory_space<vmem>>, vector<1x32xf32>
    %46 = vector.broadcast %45 : vector<1x32xf32> to vector<16x32xf32>
    %47 = arith.addf %40, %46 : vector<16x32xf32>
    %cst_16 = arith.constant 0.000000e+00 : f32
    %48 = vector.broadcast %cst_16 : f32 to vector<16x32xf32>
    %49 = arith.maximumf %47, %48 : vector<16x32xf32>
    %50 = vector.broadcast %44 : vector<16x1xf32> to vector<16x32xf32>
    %51 = arith.mulf %49, %50 : vector<16x32xf32>
    %cst_17 = arith.constant 0.000000e+00 : f32
    %52 = vector.broadcast %cst_17 : f32 to vector<16x32xf32>
    %53 = vector.extract_strided_slice %51 {offsets = [15, 0], sizes = [1, 32], strides = [1, 1]} : vector<16x32xf32> to vector<1x32xf32>
    %54 = vector.extract_strided_slice %51 {offsets = [0, 0], sizes = [15, 32], strides = [1, 1]} : vector<16x32xf32> to vector<15x32xf32>
    %55 = tpu.concatenate %53, %54 in 0 : vector<1x32xf32>, vector<15x32xf32> -> vector<16x32xf32>
    %c0_18 = arith.constant 0 : index
    %c0_19 = arith.constant 0 : index
    %56 = vector.load %arg4[%c0_18, %c0_19] : memref<96x32xf32, #tpu.memory_space<vmem>>, vector<32x32xf32>
    %cst_20 = arith.constant dense<0.000000e+00> : vector<16x32xf32>
    %57 = tpu.matmul %55, %56, %cst_20 {dimension_numbers = #tpu.dot_dimension_numbers<[1], [0], [0], [1], [0, 0, 1, 1], [], []>} : vector<16x32xf32>, vector<32x32xf32>, vector<16x32xf32> -> vector<16x32xf32>
    %58 = arith.addf %52, %57 : vector<16x32xf32>
    %c32_21 = arith.constant 32 : index
    %c0_22 = arith.constant 0 : index
    %59 = vector.load %arg4[%c32_21, %c0_22] : memref<96x32xf32, #tpu.memory_space<vmem>>, vector<32x32xf32>
    %cst_23 = arith.constant dense<0.000000e+00> : vector<16x32xf32>
    %60 = tpu.matmul %51, %59, %cst_23 {dimension_numbers = #tpu.dot_dimension_numbers<[1], [0], [0], [1], [0, 0, 1, 1], [], []>} : vector<16x32xf32>, vector<32x32xf32>, vector<16x32xf32> -> vector<16x32xf32>
    %61 = arith.addf %58, %60 : vector<16x32xf32>
    %62 = vector.extract_strided_slice %51 {offsets = [1, 0], sizes = [15, 32], strides = [1, 1]} : vector<16x32xf32> to vector<15x32xf32>
    %63 = vector.extract_strided_slice %51 {offsets = [0, 0], sizes = [1, 32], strides = [1, 1]} : vector<16x32xf32> to vector<1x32xf32>
    %64 = tpu.concatenate %62, %63 in 0 : vector<15x32xf32>, vector<1x32xf32> -> vector<16x32xf32>
    %c64_24 = arith.constant 64 : index
    %c0_25 = arith.constant 0 : index
    %65 = vector.load %arg4[%c64_24, %c0_25] : memref<96x32xf32, #tpu.memory_space<vmem>>, vector<32x32xf32>
    %cst_26 = arith.constant dense<0.000000e+00> : vector<16x32xf32>
    %66 = tpu.matmul %64, %65, %cst_26 {dimension_numbers = #tpu.dot_dimension_numbers<[1], [0], [0], [1], [0, 0, 1, 1], [], []>} : vector<16x32xf32>, vector<32x32xf32>, vector<16x32xf32> -> vector<16x32xf32>
    %67 = arith.addf %61, %66 : vector<16x32xf32>
    %c6_i32_27 = arith.constant 6 : i32
    %68 = vector.broadcast %c6_i32_27 : i32 to vector<16x1xi32>
    %69 = arith.cmpi slt, %24, %68 : vector<16x1xi32>
    %70 = arith.extui %69 : vector<16x1xi1> to vector<16x1xi32>
    %71 = arith.sitofp %70 : vector<16x1xi32> to vector<16x1xf32>
    %c0_28 = arith.constant 0 : index
    %c0_29 = arith.constant 0 : index
    %72 = vector.load %arg5[%c0_28, %c0_29] : memref<1x32xf32, #tpu.memory_space<vmem>>, vector<1x32xf32>
    %73 = vector.broadcast %72 : vector<1x32xf32> to vector<16x32xf32>
    %74 = arith.addf %67, %73 : vector<16x32xf32>
    %cst_30 = arith.constant 0.000000e+00 : f32
    %75 = vector.broadcast %cst_30 : f32 to vector<16x32xf32>
    %76 = arith.maximumf %74, %75 : vector<16x32xf32>
    %77 = vector.broadcast %71 : vector<16x1xf32> to vector<16x32xf32>
    %78 = arith.mulf %76, %77 : vector<16x32xf32>
    %79 = vector.shape_cast %78 : vector<16x32xf32> to vector<2x8x32xf32>
    %cst_31 = arith.constant dense<0xFF800000> : vector<2x32xf32>
    %80 = vector.multi_reduction <maximumf>, %79, %cst_31 [1] : vector<2x8x32xf32> to vector<2x32xf32>
    %c0_32 = arith.constant 0 : index
    %c0_33 = arith.constant 0 : index
    %81 = vector.load %arg6[%c0_32, %c0_33] : memref<32x1xf32, #tpu.memory_space<vmem>>, vector<32x1xf32>
    %cst_34 = arith.constant dense<0.000000e+00> : vector<2x1xf32>
    %82 = tpu.matmul %80, %81, %cst_34 {dimension_numbers = #tpu.dot_dimension_numbers<[1], [0], [0], [1], [0, 0, 1, 1], [], []>} : vector<2x32xf32>, vector<32x1xf32>, vector<2x1xf32> -> vector<2x1xf32>
    %c0_35 = arith.constant 0 : index
    %83 = memref.load %arg7[%c0_35] : memref<1xf32, #tpu.memory_space<smem>>
    %84 = vector.broadcast %83 : f32 to vector<2x1xf32>
    %85 = arith.addf %82, %84 : vector<2x1xf32>
    %86 = arith.negf %85 : vector<2x1xf32>
    %87 = math.exp %86 : vector<2x1xf32>
    %cst_36 = arith.constant 1.000000e+00 : f32
    %88 = vector.broadcast %cst_36 : f32 to vector<2x1xf32>
    %89 = arith.addf %88, %87 : vector<2x1xf32>
    %90 = arith.divf %88, %89 : vector<2x1xf32>
    %c0_37 = arith.constant 0 : index
    %c0_38 = arith.constant 0 : index
    %91 = vector.load %arg8[%c0_37, %c0_38] : memref<2x1xf32, #tpu.memory_space<vmem>>, vector<2x1xf32>
    tpu.vector_store %arg8[%c0_37, %c0_38], %90 {strides = array<i32>} : memref<2x1xf32, #tpu.memory_space<vmem>>, vector<2x1xf32>,
    return
  }
}

</mosaic_0001>

<llo_original>
// kernel: forward.1
$region0: #{forward.1}
  #allocation0 [shape = 'u32[]', space=smem, size = 0x4, offset = 0x4, fixed_abs, tag = 'smem constant byte address 0x4 - core index']
  #allocation1 [shape = 'u32[144,128]{1,0:T(1,128)}', space=vmem, size = 0x12000, scoped, tag = 'internal scratch']
  #allocation2 [shape = 'f32[1]{0:T(128)S(6)}', space=smem, size = 0x200, scoped, tag = 'scoped memory for forward.1']
  %s0 = inlined_call_operand.vmem [shape: s32[16,1], index: 0, kind: input, shape index: {}]
  %s1 = inlined_call_operand.vmem [shape: f32[64,32], index: 1, kind: input, shape index: {}]
  %s2 = inlined_call_operand.vmem [shape: f32[96,32], index: 2, kind: input, shape index: {}]
  %s3 = inlined_call_operand.vmem [shape: f32[1,32], index: 3, kind: input, shape index: {}]
  %s4 = inlined_call_operand.vmem [shape: f32[96,32], index: 4, kind: input, shape index: {}]
  %s5 = inlined_call_operand.vmem [shape: f32[1,32], index: 5, kind: input, shape index: {}]
  %s6 = inlined_call_operand.vmem [shape: f32[32,1], index: 6, kind: input, shape index: {}]
  %s7 = inlined_call_operand.<no memory space> [shape: f32[1], index: 7, kind: input, shape index: {}]
  %s8 = inlined_call_operand.vmem [shape: f32[2,1], index: 8, kind: output, shape index: {}]
  %s9 = sld [smem:[#allocation0]]
  $region42: #{forward.1} parent=0
    _
  %s11 = ssub.s32 1, %s9
  %s12 = scalar_select 0, %s11, %s9
  %13 = sst [smem:[#allocation2]] %s7
  // Predicated region
  $region2: #{forward.1} parent=0 // pred_check
    _
  $region3: #{forward.1} parent=0 // pred_check_branch
    %15 = sbr.rel (0) target = $region5
  $region4: #{forward.1} parent=0 // pred_region
    _
  $region5: #{forward.1} parent=0 // pred_fallthru
    _
  // Predicated region
  $region6: #{forward.1} parent=0 // pred_check
    _
  $region7: #{forward.1} parent=0 // pred_check_branch
    %17 = sbr.rel (0) target = $region9
  $region8: #{forward.1} parent=0 // pred_region
    _
  $region9: #{forward.1} parent=0 // pred_fallthru
    _
  // Predicated region
  $region10: #{forward.1} parent=0 // pred_check
    _
  $region11: #{forward.1} parent=0 // pred_check_branch
    %19 = sbr.rel (0) target = $region13
  $region12: #{forward.1} parent=0 // pred_region
    _
  $region13: #{forward.1} parent=0 // pred_fallthru
    _
  // Predicated region
  $region14: #{forward.1} parent=0 // pred_check
    _
  $region15: #{forward.1} parent=0 // pred_check_branch
    %21 = sbr.rel (0) target = $region17
  $region16: #{forward.1} parent=0 // pred_region
    _
  $region17: #{forward.1} parent=0 // pred_fallthru
    _
  // Predicated region
  $region18: #{forward.1} parent=0 // pred_check
    _
  $region19: #{forward.1} parent=0 // pred_check_branch
    %23 = sbr.rel (0) target = $region21
  $region20: #{forward.1} parent=0 // pred_region
    _
  $region21: #{forward.1} parent=0 // pred_fallthru
    _
  // Predicated region
  $region22: #{forward.1} parent=0 // pred_check
    _
  $region23: #{forward.1} parent=0 // pred_check_branch
    %25 = sbr.rel (0) target = $region25
  $region24: #{forward.1} parent=0 // pred_region
    _
  $region25: #{forward.1} parent=0 // pred_fallthru
    _
  // Predicated region
  $region26: #{forward.1} parent=0 // pred_check
    _
  $region27: #{forward.1} parent=0 // pred_check_branch
    %27 = sbr.rel (0) target = $region29
  $region28: #{forward.1} parent=0 // pred_region
    _
  $region29: #{forward.1} parent=0 // pred_fallthru
    _
  // Predicated region
  $region30: #{forward.1} parent=0 // pred_check
    _
  $region31: #{forward.1} parent=0 // pred_check_branch
    %29 = sbr.rel (0) target = $region33
  $region32: #{forward.1} parent=0 // pred_region
    _
  $region33: #{forward.1} parent=0 // pred_fallthru
    _
  %v30 = vlaneseq
  %v31 = vand.u32 %v30, 127
  %v32 = vld [vmem:[%s0] sm:$0xff]
  %v33 = vld [vmem:[%s0 + $0x8] sm:$0xff]
  %34 = vset.pattern.permute.xlu0 0
  %35 = vperm.xlu0 %34, %v32
  %v36 = vpop.permute.xlu0 %35
  %37 = vset.pattern.permute.xlu0 0
  %38 = vperm.xlu0 %37, %v33
  %v39 = vpop.permute.xlu0 %38
  %vm40 = vcmp.eq.s32.totalorder %v31, %v36
  %vm41 = vcmp.eq.s32.totalorder %v31, %v39
  %v42 = vsel %vm40, 1, 0
  %v43 = vsel %vm41, 1, 0
  %v44 = vcvt.s32.f32 %v42
  %v45 = vcvt.s32.f32 %v43
  %v46 = vld [vmem:[%s1] sm:$0xff]
  %v47 = vld [vmem:[%s1 + $0x8] sm:$0xff]
  %v48 = vld [vmem:[%s1 + $0x10] sm:$0xff]
  %v49 = vld [vmem:[%s1 + $0x18] sm:$0xff]
  %v50 = vld [vmem:[%s1 + $0x20] sm:$0xff]
  %v51 = vld [vmem:[%s1 + $0x28] sm:$0xff]
  %v52 = vld [vmem:[%s1 + $0x30] sm:$0xff]
  %v53 = vld [vmem:[%s1 + $0x38] sm:$0xff]
  %vm54 = vcmask 523264
  %v56 = vsel %vm54, %v44, 0
  %v59 = vsel %vm54, %v45, 0
  %61 = vmatprep.subr.mxu0 0.0
  %62 = vmatpush1.msra.mxu0 %v46
  %63 = vmatprep.subr.mxu0 0.0
  %64 = vmatpush1.msra.mxu0 %v47
  %65 = vmatprep.subr.mxu0 0.0
  %66 = vmatpush1.msra.mxu0 %v48
  %67 = vmatprep.subr.mxu0 0.0
  %68 = vmatpush1.msra.mxu0 %v49
  %69 = vmatprep.subr.mxu0 0.0
  %70 = vmatpush1.msra.mxu0 %v50
  %71 = vmatprep.subr.mxu0 0.0
  %72 = vmatpush1.msra.mxu0 %v51
  %73 = vmatprep.subr.mxu0 0.0
  %74 = vmatpush1.msra.mxu0 %v52
  %75 = vmatprep.subr.mxu0 0.0
  %76 = vmatpush1.msra.mxu0 %v53
  %77 = vmatprep.subr.mxu0 0.0
  %78 = vmatpush1.msra.mxu0 0.0
  %79 = vmatprep.subr.mxu0 0.0
  %80 = vmatpush1.msra.mxu0 0.0
  %81 = vmatprep.subr.mxu0 0.0
  %82 = vmatpush1.msra.mxu0 0.0
  %83 = vmatprep.subr.mxu0 0.0
  %84 = vmatpush1.msra.mxu0 0.0
  %85 = vmatprep.subr.mxu0 0.0
  %86 = vmatpush1.msra.mxu0 0.0
  %87 = vmatprep.subr.mxu0 0.0
  %88 = vmatpush1.msra.mxu0 0.0
  %89 = vmatprep.subr.mxu0 0.0
  %90 = vmatpush1.msra.mxu0 0.0
  %91 = vmatprep.subr.mxu0 0.0
  %92 = vmatpush1.msra.mxu0 0.0
  %93 = vmatprep.subr.mxu0 0.0
  %94 = vmatpush1.msra.mxu0 0.0
  %95 = vmatprep.subr.mxu0 0.0
  %96 = vmatpush1.msra.mxu0 0.0
  %97 = vmatprep.subr.mxu0 0.0
  %98 = vmatpush1.msra.mxu0 0.0
  %99 = vmatprep.subr.mxu0 0.0
  %100 = vmatpush1.msra.mxu0 0.0
  %101 = vmatprep.subr.mxu0 0.0
  %102 = vmatpush1.msra.mxu0 0.0
  %103 = vmatprep.subr.mxu0 0.0
  %104 = vmatpush1.msra.mxu0 0.0
  %105 = vmatprep.subr.mxu0 0.0
  %106 = vmatpush1.msra.mxu0 0.0
  %107 = vmatprep.subr.mxu0 0.0
  %108 = vmatpush1.msra.mxu0 0.0
  %109 = vmatprep.subr.mxu0 0.0
  %110 = vmatpush1.msra.mxu0 0.0
  %111 = vmatprep.subr.mxu0 0.0
  %112 = vmatpush1.msra.mxu0 0.0
  %113 = vmatprep.subr.mxu0 0.0
  %114 = vmatpush1.msra.mxu0 0.0
  %115 = vmatprep.subr.mxu0 0.0
  %116 = vmatpush1.msra.mxu0 0.0
  %117 = vmatprep.subr.mxu0 0.0
  %118 = vmatpush1.msra.mxu0 0.0
  %119 = vmatprep.subr.mxu0 0.0
  %120 = vmatpush1.msra.mxu0 0.0
  %121 = vmatprep.subr.mxu0 0.0
  %122 = vmatpush1.msra.mxu0 0.0
  %123 = vmatprep.subr.mxu0 0.0
  %124 = vmatpush1.msra.mxu0 0.0
  %125 = vmatprep.mubr.f32.mxu0 0.0
  %126 = vmatmul.mubr.f32.gmra.mrb[0].mxu0 %v56
  %v127 = vpop.f32.mrb[0].mxu0
  %v128 = vadd.f32 0.0, %v127
  %v129 = vpop.f32.mrb[0].mxu0
  %130 = vmatprep.mubr.f32.mxu0 0.0
  %131 = vmatmul.mubr.f32.gmra.mrb[0].mxu0 %v59
  %v132 = vpop.f32.mrb[0].mxu0
  %v133 = vadd.f32 0.0, %v132
  %v134 = vpop.f32.mrb[0].mxu0
  %135 = vdwg.mxu0
  %v136 = vlaneseq
  %v137 = vshrl.u32 %v136, 7
  %v138 = vadd.s32 %v137, 8
  %vm139 = vcmp.lt.s32.totalorder %v137, 0
  %v140 = vsub.s32 0, %v137
  %v141 = vsel %vm139, %v140, %v137
  %v142 = vshrl.u32 %v141, 3
  %v143 = vand.u32 %v141, 7
  %v144 = vsub.s32 0, %v143
  %v145 = vsel %vm139, %v144, %v143
  %vm146 = vcmp.lt.s32.totalorder %v138, 0
  %v147 = vsub.s32 0, %v138
  %v148 = vsel %vm146, %v147, %v138
  %v149 = vshrl.u32 %v148, 3
  %v150 = vand.u32 %v148, 7
  %v151 = vsub.s32 0, %v150
  %v152 = vsel %vm146, %v151, %v150
  %vm153 = vcmp.ne.s32.totalorder %v145, 0
  %vm154 = vcmp.ne.s32.totalorder %v152, 0
  %vm155 = vcmp.lt.s32.totalorder %v145, 0
  %vm156 = vcmp.lt.s32.totalorder %v152, 0
  %vm157 = vmand %vm155, %vm153
  %vm158 = vmand %vm156, %vm154
  %v159 = vadd.s32 %v145, 8
  %v160 = vadd.s32 %v152, 8
  %v161 = vsel %vm157, %v159, %v145
  %v162 = vsel %vm158, %v160, %v152
  %v163 = vld [vmem:[%s2] sm:$0xff]
  %v164 = vld [vmem:[%s2 + $0x8] sm:$0xff]
  %v165 = vld [vmem:[%s2 + $0x10] sm:$0xff]
  %v166 = vld [vmem:[%s2 + $0x18] sm:$0xff]
  %vm169 = vcmask 1046528
  %v170 = vrot.slane %v128, 1
  %v171 = vrot.slane %v133, 1
  %v172 = vsel %vm169, %v170, %v171
  %v175 = vsel %vm169, %v171, %v170
  %v176 = vld [vmem:[%s2 + $0x20] sm:$0xff]
  %v177 = vld [vmem:[%s2 + $0x28] sm:$0xff]
  %v178 = vld [vmem:[%s2 + $0x30] sm:$0xff]
  %v179 = vld [vmem:[%s2 + $0x38] sm:$0xff]
  %vm180 = vcmask 261120
  %v181 = vsel %vm180, %v172, 0
  %v184 = vsel %vm180, %v175, 0
  %186 = vmatprep.subr.mxu0 0.0
  %187 = vmatpush1.msra.mxu0 %v176
  %188 = vmatprep.subr.mxu0 0.0
  %189 = vmatpush1.msra.mxu0 %v177
  %190 = vmatprep.subr.mxu0 0.0
  %191 = vmatpush1.msra.mxu0 %v178
  %192 = vmatprep.subr.mxu0 0.0
  %193 = vmatpush1.msra.mxu0 %v179
  %194 = vmatprep.subr.mxu0 0.0
  %195 = vmatpush1.msra.mxu0 0.0
  %196 = vmatprep.subr.mxu0 0.0
  %197 = vmatpush1.msra.mxu0 0.0
  %198 = vmatprep.subr.mxu0 0.0
  %199 = vmatpush1.msra.mxu0 0.0
  %200 = vmatprep.subr.mxu0 0.0
  %201 = vmatpush1.msra.mxu0 0.0
  %202 = vmatprep.subr.mxu0 0.0
  %203 = vmatpush1.msra.mxu0 0.0
  %204 = vmatprep.subr.mxu0 0.0
  %205 = vmatpush1.msra.mxu0 0.0
  %206 = vmatprep.subr.mxu0 0.0
  %207 = vmatpush1.msra.mxu0 0.0
  %208 = vmatprep.subr.mxu0 0.0
  %209 = vmatpush1.msra.mxu0 0.0
  %210 = vmatprep.subr.mxu0 0.0
  %211 = vmatpush1.msra.mxu0 0.0
  %212 = vmatprep.subr.mxu0 0.0
  %213 = vmatpush1.msra.mxu0 0.0
  %214 = vmatprep.subr.mxu0 0.0
  %215 = vmatpush1.msra.mxu0 0.0
  %216 = vmatprep.subr.mxu0 0.0
  %217 = vmatpush1.msra.mxu0 0.0
  %218 = vmatprep.subr.mxu0 0.0
  %219 = vmatpush1.msra.mxu0 0.0
  %220 = vmatprep.subr.mxu0 0.0
  %221 = vmatpush1.msra.mxu0 0.0
  %222 = vmatprep.subr.mxu0 0.0
  %223 = vmatpush1.msra.mxu0 0.0
  %224 = vmatprep.subr.mxu0 0.0
  %225 = vmatpush1.msra.mxu0 0.0
  %226 = vmatprep.subr.mxu0 0.0
  %227 = vmatpush1.msra.mxu0 0.0
  %228 = vmatprep.subr.mxu0 0.0
  %229 = vmatpush1.msra.mxu0 0.0
  %230 = vmatprep.subr.mxu0 0.0
  %231 = vmatpush1.msra.mxu0 0.0
  %232 = vmatprep.subr.mxu0 0.0
  %233 = vmatpush1.msra.mxu0 0.0
  %234 = vmatprep.subr.mxu0 0.0
  %235 = vmatpush1.msra.mxu0 0.0
  %236 = vmatprep.subr.mxu0 0.0
  %237 = vmatpush1.msra.mxu0 0.0
  %238 = vmatprep.subr.mxu0 0.0
  %239 = vmatpush1.msra.mxu0 0.0
  %240 = vmatprep.subr.mxu0 0.0
  %241 = vmatpush1.msra.mxu0 0.0
  %242 = vmatprep.subr.mxu0 0.0
  %243 = vmatpush1.msra.mxu0 0.0
  %244 = vmatprep.subr.mxu0 0.0
  %245 = vmatpush1.msra.mxu0 0.0
  %246 = vmatprep.subr.mxu0 0.0
  %247 = vmatpush1.msra.mxu0 0.0
  %248 = vmatprep.subr.mxu0 0.0
  %249 = vmatpush1.msra.mxu0 0.0
  %250 = vmatprep.mubr.f32.mxu0 0.0
  %251 = vmatmul.mubr.f32.gmra.mrb[0].mxu0 %v181
  %v252 = vpop.f32.mrb[0].mxu0
  %v253 = vadd.f32 0.0, %v252
  %v254 = vpop.f32.mrb[0].mxu0
  %255 = vmatprep.mubr.f32.mxu0 0.0
  %256 = vmatmul.mubr.f32.gmra.mrb[0].mxu0 %v184
  %v257 = vpop.f32.mrb[0].mxu0
  %v258 = vadd.f32 0.0, %v257
  %v259 = vpop.f32.mrb[0].mxu0
  %260 = vdwg.mxu0
  %v261 = vsel %vm180, %v128, 0
  %v263 = vsel %vm180, %v133, 0
  %265 = vmatprep.subr.mxu0 0.0
  %266 = vmatpush1.msra.mxu0 %v163
  %267 = vmatprep.subr.mxu0 0.0
  %268 = vmatpush1.msra.mxu0 %v164
  %269 = vmatprep.subr.mxu0 0.0
  %270 = vmatpush1.msra.mxu0 %v165
  %271 = vmatprep.subr.mxu0 0.0
  %272 = vmatpush1.msra.mxu0 %v166
  %273 = vmatprep.subr.mxu0 0.0
  %274 = vmatpush1.msra.mxu0 0.0
  %275 = vmatprep.subr.mxu0 0.0
  %276 = vmatpush1.msra.mxu0 0.0
  %277 = vmatprep.subr.mxu0 0.0
  %278 = vmatpush1.msra.mxu0 0.0
  %279 = vmatprep.subr.mxu0 0.0
  %280 = vmatpush1.msra.mxu0 0.0
  %281 = vmatprep.subr.mxu0 0.0
  %282 = vmatpush1.msra.mxu0 0.0
  %283 = vmatprep.subr.mxu0 0.0
  %284 = vmatpush1.msra.mxu0 0.0
  %285 = vmatprep.subr.mxu0 0.0
  %286 = vmatpush1.msra.mxu0 0.0
  %287 = vmatprep.subr.mxu0 0.0
  %288 = vmatpush1.msra.mxu0 0.0
  %289 = vmatprep.subr.mxu0 0.0
  %290 = vmatpush1.msra.mxu0 0.0
  %291 = vmatprep.subr.mxu0 0.0
  %292 = vmatpush1.msra.mxu0 0.0
  %293 = vmatprep.subr.mxu0 0.0
  %294 = vmatpush1.msra.mxu0 0.0
  %295 = vmatprep.subr.mxu0 0.0
  %296 = vmatpush1.msra.mxu0 0.0
  %297 = vmatprep.subr.mxu0 0.0
  %298 = vmatpush1.msra.mxu0 0.0
  %299 = vmatprep.subr.mxu0 0.0
  %300 = vmatpush1.msra.mxu0 0.0
  %301 = vmatprep.subr.mxu0 0.0
  %302 = vmatpush1.msra.mxu0 0.0
  %303 = vmatprep.subr.mxu0 0.0
  %304 = vmatpush1.msra.mxu0 0.0
  %305 = vmatprep.subr.mxu0 0.0
  %306 = vmatpush1.msra.mxu0 0.0
  %307 = vmatprep.subr.mxu0 0.0
  %308 = vmatpush1.msra.mxu0 0.0
  %309 = vmatprep.subr.mxu0 0.0
  %310 = vmatpush1.msra.mxu0 0.0
  %311 = vmatprep.subr.mxu0 0.0
  %312 = vmatpush1.msra.mxu0 0.0
  %313 = vmatprep.subr.mxu0 0.0
  %314 = vmatpush1.msra.mxu0 0.0
  %315 = vmatprep.subr.mxu0 0.0
  %316 = vmatpush1.msra.mxu0 0.0
  %317 = vmatprep.subr.mxu0 0.0
  %318 = vmatpush1.msra.mxu0 0.0
  %319 = vmatprep.subr.mxu0 0.0
  %320 = vmatpush1.msra.mxu0 0.0
  %321 = vmatprep.subr.mxu0 0.0
  %322 = vmatpush1.msra.mxu0 0.0
  %323 = vmatprep.subr.mxu0 0.0
  %324 = vmatpush1.msra.mxu0 0.0
  %325 = vmatprep.subr.mxu0 0.0
  %326 = vmatpush1.msra.mxu0 0.0
  %327 = vmatprep.subr.mxu0 0.0
  %328 = vmatpush1.msra.mxu0 0.0
  %329 = vmatprep.mubr.f32.mxu0 0.0
  %330 = vmatmul.mubr.f32.gmra.mrb[0].mxu0 %v261
  %v331 = vpop.f32.mrb[0].mxu0
  %v332 = vadd.f32 %v253, %v331
  %v333 = vpop.f32.mrb[0].mxu0
  %334 = vmatprep.mubr.f32.mxu0 0.0
  %335 = vmatmul.mubr.f32.gmra.mrb[0].mxu0 %v263
  %v336 = vpop.f32.mrb[0].mxu0
  %v337 = vadd.f32 %v258, %v336
  %v338 = vpop.f32.mrb[0].mxu0
  %339 = vdwg.mxu0
  %vm340 = vcmask 1045504
  %v341 = vrot.slane %v128, 2
  %v342 = vrot.slane %v133, 2
  %v343 = vsel %vm340, %v341, %v342
  %v346 = vsel %vm340, %v342, %v341
  %v347 = vld [vmem:[%s2 + $0x40] sm:$0xff]
  %v348 = vld [vmem:[%s2 + $0x48] sm:$0xff]
  %v349 = vld [vmem:[%s2 + $0x50] sm:$0xff]
  %v350 = vld [vmem:[%s2 + $0x58] sm:$0xff]
  %v351 = vsel %vm180, %v343, 0
  %v354 = vsel %vm180, %v346, 0
  %356 = vmatprep.subr.mxu0 0.0
  %357 = vmatpush1.msra.mxu0 %v347
  %358 = vmatprep.subr.mxu0 0.0
  %359 = vmatpush1.msra.mxu0 %v348
  %360 = vmatprep.subr.mxu0 0.0
  %361 = vmatpush1.msra.mxu0 %v349
  %362 = vmatprep.subr.mxu0 0.0
  %363 = vmatpush1.msra.mxu0 %v350
  %364 = vmatprep.subr.mxu0 0.0
  %365 = vmatpush1.msra.mxu0 0.0
  %366 = vmatprep.subr.mxu0 0.0
  %367 = vmatpush1.msra.mxu0 0.0
  %368 = vmatprep.subr.mxu0 0.0
  %369 = vmatpush1.msra.mxu0 0.0
  %370 = vmatprep.subr.mxu0 0.0
  %371 = vmatpush1.msra.mxu0 0.0
  %372 = vmatprep.subr.mxu0 0.0
  %373 = vmatpush1.msra.mxu0 0.0
  %374 = vmatprep.subr.mxu0 0.0
  %375 = vmatpush1.msra.mxu0 0.0
  %376 = vmatprep.subr.mxu0 0.0
  %377 = vmatpush1.msra.mxu0 0.0
  %378 = vmatprep.subr.mxu0 0.0
  %379 = vmatpush1.msra.mxu0 0.0
  %380 = vmatprep.subr.mxu0 0.0
  %381 = vmatpush1.msra.mxu0 0.0
  %382 = vmatprep.subr.mxu0 0.0
  %383 = vmatpush1.msra.mxu0 0.0
  %384 = vmatprep.subr.mxu0 0.0
  %385 = vmatpush1.msra.mxu0 0.0
  %386 = vmatprep.subr.mxu0 0.0
  %387 = vmatpush1.msra.mxu0 0.0
  %388 = vmatprep.subr.mxu0 0.0
  %389 = vmatpush1.msra.mxu0 0.0
  %390 = vmatprep.subr.mxu0 0.0
  %391 = vmatpush1.msra.mxu0 0.0
  %392 = vmatprep.subr.mxu0 0.0
  %393 = vmatpush1.msra.mxu0 0.0
  %394 = vmatprep.subr.mxu0 0.0
  %395 = vmatpush1.msra.mxu0 0.0
  %396 = vmatprep.subr.mxu0 0.0
  %397 = vmatpush1.msra.mxu0 0.0
  %398 = vmatprep.subr.mxu0 0.0
  %399 = vmatpush1.msra.mxu0 0.0
  %400 = vmatprep.subr.mxu0 0.0
  %401 = vmatpush1.msra.mxu0 0.0
  %402 = vmatprep.subr.mxu0 0.0
  %403 = vmatpush1.msra.mxu0 0.0
  %404 = vmatprep.subr.mxu0 0.0
  %405 = vmatpush1.msra.mxu0 0.0
  %406 = vmatprep.subr.mxu0 0.0
  %407 = vmatpush1.msra.mxu0 0.0
  %408 = vmatprep.subr.mxu0 0.0
  %409 = vmatpush1.msra.mxu0 0.0
  %410 = vmatprep.subr.mxu0 0.0
  %411 = vmatpush1.msra.mxu0 0.0
  %412 = vmatprep.subr.mxu0 0.0
  %413 = vmatpush1.msra.mxu0 0.0
  %414 = vmatprep.subr.mxu0 0.0
  %415 = vmatpush1.msra.mxu0 0.0
  %416 = vmatprep.subr.mxu0 0.0
  %417 = vmatpush1.msra.mxu0 0.0
  %418 = vmatprep.subr.mxu0 0.0
  %419 = vmatpush1.msra.mxu0 0.0
  %420 = vmatprep.mubr.f32.mxu0 0.0
  %421 = vmatmul.mubr.f32.gmra.mrb[0].mxu0 %v351
  %v422 = vpop.f32.mrb[0].mxu0
  %v423 = vadd.f32 0.0, %v422
  %v424 = vpop.f32.mrb[0].mxu0
  %425 = vmatprep.mubr.f32.mxu0 0.0
  %426 = vmatmul.mubr.f32.gmra.mrb[0].mxu0 %v354
  %v427 = vpop.f32.mrb[0].mxu0
  %v428 = vadd.f32 0.0, %v427
  %v429 = vpop.f32.mrb[0].mxu0
  %430 = vdwg.mxu0
  %v431 = vadd.f32 %v332, %v423
  %v432 = vadd.f32 %v337, %v428
  %vm433 = vcmp.lt.s32.totalorder %v161, 6
  %vm434 = vcmp.lt.s32.totalorder %v162, 6
  %v435 = vsel %vm433, 1, 0
  %v436 = vsel %vm434, 1, 0
  %v437 = vcvt.s32.f32 %v435
  %v438 = vcvt.s32.f32 %v436
  %v439 = vld [vmem:[%s3] sm:$0x1]
  %v441 = vlaneseq
  %v442 = vshrl.u32 %v441, 7
  %v443 = vsub.s32 0, %v442
  %v444 = vrot.slane %v439, %v443
  %v446 = vadd.f32 %v431, %v444
  %v447 = vadd.f32 %v432, %v444
  %v448 = vmax.f32 %v446, 0.0
  %v449 = vmax.f32 %v447, 0.0
  %v450 = vmul.f32 %v448, %v437
  %v451 = vmul.f32 %v449, %v438
  %v453 = vrot.slane %v451, 7
  %vm456 = vcmask 1040384
  %v457 = vrot.slane %v450, 7
  %v458 = vsel %vm456, %v457, %v453
  %v460 = vsel %vm456, %v453, %v457
  %v461 = vld [vmem:[%s4] sm:$0xff]
  %v462 = vld [vmem:[%s4 + $0x8] sm:$0xff]
  %v463 = vld [vmem:[%s4 + $0x10] sm:$0xff]
  %v464 = vld [vmem:[%s4 + $0x18] sm:$0xff]
  %v465 = vld [vmem:[%s4 + $0x20] sm:$0xff]
  %v466 = vld [vmem:[%s4 + $0x28] sm:$0xff]
  %v467 = vld [vmem:[%s4 + $0x30] sm:$0xff]
  %v468 = vld [vmem:[%s4 + $0x38] sm:$0xff]
  %v469 = vsel %vm180, %v450, 0
  %v471 = vsel %vm180, %v451, 0
  %473 = vmatprep.subr.mxu0 0.0
  %474 = vmatpush1.msra.mxu0 %v465
  %475 = vmatprep.subr.mxu0 0.0
  %476 = vmatpush1.msra.mxu0 %v466
  %477 = vmatprep.subr.mxu0 0.0
  %478 = vmatpush1.msra.mxu0 %v467
  %479 = vmatprep.subr.mxu0 0.0
  %480 = vmatpush1.msra.mxu0 %v468
  %481 = vmatprep.subr.mxu0 0.0
  %482 = vmatpush1.msra.mxu0 0.0
  %483 = vmatprep.subr.mxu0 0.0
  %484 = vmatpush1.msra.mxu0 0.0
  %485 = vmatprep.subr.mxu0 0.0
  %486 = vmatpush1.msra.mxu0 0.0
  %487 = vmatprep.subr.mxu0 0.0
  %488 = vmatpush1.msra.mxu0 0.0
  %489 = vmatprep.subr.mxu0 0.0
  %490 = vmatpush1.msra.mxu0 0.0
  %491 = vmatprep.subr.mxu0 0.0
  %492 = vmatpush1.msra.mxu0 0.0
  %493 = vmatprep.subr.mxu0 0.0
  %494 = vmatpush1.msra.mxu0 0.0
  %495 = vmatprep.subr.mxu0 0.0
  %496 = vmatpush1.msra.mxu0 0.0
  %497 = vmatprep.subr.mxu0 0.0
  %498 = vmatpush1.msra.mxu0 0.0
  %499 = vmatprep.subr.mxu0 0.0
  %500 = vmatpush1.msra.mxu0 0.0
  %501 = vmatprep.subr.mxu0 0.0
  %502 = vmatpush1.msra.mxu0 0.0
  %503 = vmatprep.subr.mxu0 0.0
  %504 = vmatpush1.msra.mxu0 0.0
  %505 = vmatprep.subr.mxu0 0.0
  %506 = vmatpush1.msra.mxu0 0.0
  %507 = vmatprep.subr.mxu0 0.0
  %508 = vmatpush1.msra.mxu0 0.0
  %509 = vmatprep.subr.mxu0 0.0
  %510 = vmatpush1.msra.mxu0 0.0
  %511 = vmatprep.subr.mxu0 0.0
  %512 = vmatpush1.msra.mxu0 0.0
  %513 = vmatprep.subr.mxu0 0.0
  %514 = vmatpush1.msra.mxu0 0.0
  %515 = vmatprep.subr.mxu0 0.0
  %516 = vmatpush1.msra.mxu0 0.0
  %517 = vmatprep.subr.mxu0 0.0
  %518 = vmatpush1.msra.mxu0 0.0
  %519 = vmatprep.subr.mxu0 0.0
  %520 = vmatpush1.msra.mxu0 0.0
  %521 = vmatprep.subr.mxu0 0.0
  %522 = vmatpush1.msra.mxu0 0.0
  %523 = vmatprep.subr.mxu0 0.0
  %524 = vmatpush1.msra.mxu0 0.0
  %525 = vmatprep.subr.mxu0 0.0
  %526 = vmatpush1.msra.mxu0 0.0
  %527 = vmatprep.subr.mxu0 0.0
  %528 = vmatpush1.msra.mxu0 0.0
  %529 = vmatprep.subr.mxu0 0.0
  %530 = vmatpush1.msra.mxu0 0.0
  %531 = vmatprep.subr.mxu0 0.0
  %532 = vmatpush1.msra.mxu0 0.0
  %533 = vmatprep.subr.mxu0 0.0
  %534 = vmatpush1.msra.mxu0 0.0
  %535 = vmatprep.subr.mxu0 0.0
  %536 = vmatpush1.msra.mxu0 0.0
  %537 = vmatprep.mubr.f32.mxu0 0.0
  %538 = vmatmul.mubr.f32.gmra.mrb[0].mxu0 %v469
  %v539 = vpop.f32.mrb[0].mxu0
  %v540 = vadd.f32 0.0, %v539
  %v541 = vpop.f32.mrb[0].mxu0
  %542 = vmatprep.mubr.f32.mxu0 0.0
  %543 = vmatmul.mubr.f32.gmra.mrb[0].mxu0 %v471
  %v544 = vpop.f32.mrb[0].mxu0
  %v545 = vadd.f32 0.0, %v544
  %v546 = vpop.f32.mrb[0].mxu0
  %547 = vdwg.mxu0
  %v549 = vsel %vm180, %v460, 0
  %v551 = vsel %vm180, %v458, 0
  %553 = vmatprep.subr.mxu0 0.0
  %554 = vmatpush1.msra.mxu0 %v461
  %555 = vmatprep.subr.mxu0 0.0
  %556 = vmatpush1.msra.mxu0 %v462
  %557 = vmatprep.subr.mxu0 0.0
  %558 = vmatpush1.msra.mxu0 %v463
  %559 = vmatprep.subr.mxu0 0.0
  %560 = vmatpush1.msra.mxu0 %v464
  %561 = vmatprep.subr.mxu0 0.0
  %562 = vmatpush1.msra.mxu0 0.0
  %563 = vmatprep.subr.mxu0 0.0
  %564 = vmatpush1.msra.mxu0 0.0
  %565 = vmatprep.subr.mxu0 0.0
  %566 = vmatpush1.msra.mxu0 0.0
  %567 = vmatprep.subr.mxu0 0.0
  %568 = vmatpush1.msra.mxu0 0.0
  %569 = vmatprep.subr.mxu0 0.0
  %570 = vmatpush1.msra.mxu0 0.0
  %571 = vmatprep.subr.mxu0 0.0
  %572 = vmatpush1.msra.mxu0 0.0
  %573 = vmatprep.subr.mxu0 0.0
  %574 = vmatpush1.msra.mxu0 0.0
  %575 = vmatprep.subr.mxu0 0.0
  %576 = vmatpush1.msra.mxu0 0.0
  %577 = vmatprep.subr.mxu0 0.0
  %578 = vmatpush1.msra.mxu0 0.0
  %579 = vmatprep.subr.mxu0 0.0
  %580 = vmatpush1.msra.mxu0 0.0
  %581 = vmatprep.subr.mxu0 0.0
  %582 = vmatpush1.msra.mxu0 0.0
  %583 = vmatprep.subr.mxu0 0.0
  %584 = vmatpush1.msra.mxu0 0.0
  %585 = vmatprep.subr.mxu0 0.0
  %586 = vmatpush1.msra.mxu0 0.0
  %587 = vmatprep.subr.mxu0 0.0
  %588 = vmatpush1.msra.mxu0 0.0
  %589 = vmatprep.subr.mxu0 0.0
  %590 = vmatpush1.msra.mxu0 0.0
  %591 = vmatprep.subr.mxu0 0.0
  %592 = vmatpush1.msra.mxu0 0.0
  %593 = vmatprep.subr.mxu0 0.0
  %594 = vmatpush1.msra.mxu0 0.0
  %595 = vmatprep.subr.mxu0 0.0
  %596 = vmatpush1.msra.mxu0 0.0
  %597 = vmatprep.subr.mxu0 0.0
  %598 = vmatpush1.msra.mxu0 0.0
  %599 = vmatprep.subr.mxu0 0.0
  %600 = vmatpush1.msra.mxu0 0.0
  %601 = vmatprep.subr.mxu0 0.0
  %602 = vmatpush1.msra.mxu0 0.0
  %603 = vmatprep.subr.mxu0 0.0
  %604 = vmatpush1.msra.mxu0 0.0
  %605 = vmatprep.subr.mxu0 0.0
  %606 = vmatpush1.msra.mxu0 0.0
  %607 = vmatprep.subr.mxu0 0.0
  %608 = vmatpush1.msra.mxu0 0.0
  %609 = vmatprep.subr.mxu0 0.0
  %610 = vmatpush1.msra.mxu0 0.0
  %611 = vmatprep.subr.mxu0 0.0
  %612 = vmatpush1.msra.mxu0 0.0
  %613 = vmatprep.subr.mxu0 0.0
  %614 = vmatpush1.msra.mxu0 0.0
  %615 = vmatprep.subr.mxu0 0.0
  %616 = vmatpush1.msra.mxu0 0.0
  %617 = vmatprep.mubr.f32.mxu0 0.0
  %618 = vmatmul.mubr.f32.gmra.mrb[0].mxu0 %v549
  %v619 = vpop.f32.mrb[0].mxu0
  %v620 = vadd.f32 %v540, %v619
  %v621 = vpop.f32.mrb[0].mxu0
  %622 = vmatprep.mubr.f32.mxu0 0.0
  %623 = vmatmul.mubr.f32.gmra.mrb[0].mxu0 %v551
  %v624 = vpop.f32.mrb[0].mxu0
  %v625 = vadd.f32 %v545, %v624
  %v626 = vpop.f32.mrb[0].mxu0
  %627 = vdwg.mxu0
  %v628 = vrot.slane %v450, 1
  %v629 = vrot.slane %v451, 1
  %v630 = vsel %vm169, %v628, %v629
  %v633 = vsel %vm169, %v629, %v628
  %v634 = vld [vmem:[%s4 + $0x40] sm:$0xff]
  %v635 = vld [vmem:[%s4 + $0x48] sm:$0xff]
  %v636 = vld [vmem:[%s4 + $0x50] sm:$0xff]
  %v637 = vld [vmem:[%s4 + $0x58] sm:$0xff]
  %v638 = vsel %vm180, %v630, 0
  %v641 = vsel %vm180, %v633, 0
  %643 = vmatprep.subr.mxu0 0.0
  %644 = vmatpush1.msra.mxu0 %v634
  %645 = vmatprep.subr.mxu0 0.0
  %646 = vmatpush1.msra.mxu0 %v635
  %647 = vmatprep.subr.mxu0 0.0
  %648 = vmatpush1.msra.mxu0 %v636
  %649 = vmatprep.subr.mxu0 0.0
  %650 = vmatpush1.msra.mxu0 %v637
  %651 = vmatprep.subr.mxu0 0.0
  %652 = vmatpush1.msra.mxu0 0.0
  %653 = vmatprep.subr.mxu0 0.0
  %654 = vmatpush1.msra.mxu0 0.0
  %655 = vmatprep.subr.mxu0 0.0
  %656 = vmatpush1.msra.mxu0 0.0
  %657 = vmatprep.subr.mxu0 0.0
  %658 = vmatpush1.msra.mxu0 0.0
  %659 = vmatprep.subr.mxu0 0.0
  %660 = vmatpush1.msra.mxu0 0.0
  %661 = vmatprep.subr.mxu0 0.0
  %662 = vmatpush1.msra.mxu0 0.0
  %663 = vmatprep.subr.mxu0 0.0
  %664 = vmatpush1.msra.mxu0 0.0
  %665 = vmatprep.subr.mxu0 0.0
  %666 = vmatpush1.msra.mxu0 0.0
  %667 = vmatprep.subr.mxu0 0.0
  %668 = vmatpush1.msra.mxu0 0.0
  %669 = vmatprep.subr.mxu0 0.0
  %670 = vmatpush1.msra.mxu0 0.0
  %671 = vmatprep.subr.mxu0 0.0
  %672 = vmatpush1.msra.mxu0 0.0
  %673 = vmatprep.subr.mxu0 0.0
  %674 = vmatpush1.msra.mxu0 0.0
  %675 = vmatprep.subr.mxu0 0.0
  %676 = vmatpush1.msra.mxu0 0.0
  %677 = vmatprep.subr.mxu0 0.0
  %678 = vmatpush1.msra.mxu0 0.0
  %679 = vmatprep.subr.mxu0 0.0
  %680 = vmatpush1.msra.mxu0 0.0
  %681 = vmatprep.subr.mxu0 0.0
  %682 = vmatpush1.msra.mxu0 0.0
  %683 = vmatprep.subr.mxu0 0.0
  %684 = vmatpush1.msra.mxu0 0.0
  %685 = vmatprep.subr.mxu0 0.0
  %686 = vmatpush1.msra.mxu0 0.0
  %687 = vmatprep.subr.mxu0 0.0
  %688 = vmatpush1.msra.mxu0 0.0
  %689 = vmatprep.subr.mxu0 0.0
  %690 = vmatpush1.msra.mxu0 0.0
  %691 = vmatprep.subr.mxu0 0.0
  %692 = vmatpush1.msra.mxu0 0.0
  %693 = vmatprep.subr.mxu0 0.0
  %694 = vmatpush1.msra.mxu0 0.0
  %695 = vmatprep.subr.mxu0 0.0
  %696 = vmatpush1.msra.mxu0 0.0
  %697 = vmatprep.subr.mxu0 0.0
  %698 = vmatpush1.msra.mxu0 0.0
  %699 = vmatprep.subr.mxu0 0.0
  %700 = vmatpush1.msra.mxu0 0.0
  %701 = vmatprep.subr.mxu0 0.0
  %702 = vmatpush1.msra.mxu0 0.0
  %703 = vmatprep.subr.mxu0 0.0
  %704 = vmatpush1.msra.mxu0 0.0
  %705 = vmatprep.subr.mxu0 0.0
  %706 = vmatpush1.msra.mxu0 0.0
  %707 = vmatprep.mubr.f32.mxu0 0.0
  %708 = vmatmul.mubr.f32.gmra.mrb[0].mxu0 %v638
  %v709 = vpop.f32.mrb[0].mxu0
  %v710 = vadd.f32 0.0, %v709
  %v711 = vpop.f32.mrb[0].mxu0
  %712 = vmatprep.mubr.f32.mxu0 0.0
  %713 = vmatmul.mubr.f32.gmra.mrb[0].mxu0 %v641
  %v714 = vpop.f32.mrb[0].mxu0
  %v715 = vadd.f32 0.0, %v714
  %v716 = vpop.f32.mrb[0].mxu0
  %717 = vdwg.mxu0
  %v718 = vadd.f32 %v620, %v710
  %v719 = vadd.f32 %v625, %v715
  %v720 = vld [vmem:[%s5] sm:$0x1]
  %v722 = vlaneseq
  %v723 = vshrl.u32 %v722, 7
  %v724 = vsub.s32 0, %v723
  %v725 = vrot.slane %v720, %v724
  %v727 = vadd.f32 %v718, %v725
  %v728 = vadd.f32 %v719, %v725
  %v729 = vmax.f32 %v727, 0.0
  %v730 = vmax.f32 %v728, 0.0
  %v731 = vmul.f32 %v729, %v437
  %v732 = vmul.f32 %v730, %v438
  %v733 = vsel %vm180, %v731, -inf
  %v734 = vrot.slane %v733, 4
  %v735 = vmax.f32 %v733, %v734
  %v736 = vrot.slane %v735, 2
  %v737 = vmax.f32 %v735, %v736
  %v738 = vrot.slane %v737, 1
  %v739 = vmax.f32 %v737, %v738
  %v740 = vsel %vm180, %v732, -inf
  %v741 = vrot.slane %v740, 4
  %v742 = vmax.f32 %v740, %v741
  %v743 = vrot.slane %v742, 2
  %v744 = vmax.f32 %v742, %v743
  %v745 = vrot.slane %v744, 1
  %v746 = vmax.f32 %v744, %v745
  %v747 = vld [vmem:[%s6] sm:$0xff]
  %v748 = vld [vmem:[%s6 + $0x8] sm:$0xff]
  %v749 = vld [vmem:[%s6 + $0x10] sm:$0xff]
  %v750 = vld [vmem:[%s6 + $0x18] sm:$0xff]
  %s751 = sld [smem:[#allocation2]]
  %v752 = vstv %s751
  %vm755 = vcmask 1041409
  %v756 = vsel %vm755, %v746, %v739
  %v757 = vsel %vm180, %v756, 0
  %759 = vmatprep.subr.mxu0 0.0
  %760 = vmatpush1.msra.mxu0 %v747
  %761 = vmatprep.subr.mxu0 0.0
  %762 = vmatpush1.msra.mxu0 %v748
  %763 = vmatprep.subr.mxu0 0.0
  %764 = vmatpush1.msra.mxu0 %v749
  %765 = vmatprep.subr.mxu0 0.0
  %766 = vmatpush1.msra.mxu0 %v750
  %767 = vmatprep.subr.mxu0 0.0
  %768 = vmatpush1.msra.mxu0 0.0
  %769 = vmatprep.subr.mxu0 0.0
  %770 = vmatpush1.msra.mxu0 0.0
  %771 = vmatprep.subr.mxu0 0.0
  %772 = vmatpush1.msra.mxu0 0.0
  %773 = vmatprep.subr.mxu0 0.0
  %774 = vmatpush1.msra.mxu0 0.0
  %775 = vmatprep.subr.mxu0 0.0
  %776 = vmatpush1.msra.mxu0 0.0
  %777 = vmatprep.subr.mxu0 0.0
  %778 = vmatpush1.msra.mxu0 0.0
  %779 = vmatprep.subr.mxu0 0.0
  %780 = vmatpush1.msra.mxu0 0.0
  %781 = vmatprep.subr.mxu0 0.0
  %782 = vmatpush1.msra.mxu0 0.0
  %783 = vmatprep.subr.mxu0 0.0
  %784 = vmatpush1.msra.mxu0 0.0
  %785 = vmatprep.subr.mxu0 0.0
  %786 = vmatpush1.msra.mxu0 0.0
  %787 = vmatprep.subr.mxu0 0.0
  %788 = vmatpush1.msra.mxu0 0.0
  %789 = vmatprep.subr.mxu0 0.0
  %790 = vmatpush1.msra.mxu0 0.0
  %791 = vmatprep.subr.mxu0 0.0
  %792 = vmatpush1.msra.mxu0 0.0
  %793 = vmatprep.subr.mxu0 0.0
  %794 = vmatpush1.msra.mxu0 0.0
  %795 = vmatprep.subr.mxu0 0.0
  %796 = vmatpush1.msra.mxu0 0.0
  %797 = vmatprep.subr.mxu0 0.0
  %798 = vmatpush1.msra.mxu0 0.0
  %799 = vmatprep.subr.mxu0 0.0
  %800 = vmatpush1.msra.mxu0 0.0
  %801 = vmatprep.subr.mxu0 0.0
  %802 = vmatpush1.msra.mxu0 0.0
  %803 = vmatprep.subr.mxu0 0.0
  %804 = vmatpush1.msra.mxu0 0.0
  %805 = vmatprep.subr.mxu0 0.0
  %806 = vmatpush1.msra.mxu0 0.0
  %807 = vmatprep.subr.mxu0 0.0
  %808 = vmatpush1.msra.mxu0 0.0
  %809 = vmatprep.subr.mxu0 0.0
  %810 = vmatpush1.msra.mxu0 0.0
  %811 = vmatprep.subr.mxu0 0.0
  %812 = vmatpush1.msra.mxu0 0.0
  %813 = vmatprep.subr.mxu0 0.0
  %814 = vmatpush1.msra.mxu0 0.0
  %815 = vmatprep.subr.mxu0 0.0
  %816 = vmatpush1.msra.mxu0 0.0
  %817 = vmatprep.subr.mxu0 0.0
  %818 = vmatpush1.msra.mxu0 0.0
  %819 = vmatprep.subr.mxu0 0.0
  %820 = vmatpush1.msra.mxu0 0.0
  %821 = vmatprep.subr.mxu0 0.0
  %822 = vmatpush1.msra.mxu0 0.0
  %823 = vmatprep.mubr.f32.mxu0 0.0
  %824 = vmatmul.mubr.f32.gmra.mrb[0].mxu0 %v757
  %v825 = vpop.f32.mrb[0].mxu0
  %v826 = vadd.f32 %v752, %v825
  %v827 = vpop.f32.mrb[0].mxu0
  %828 = vdwg.mxu0
  %v829 = vxor.u32 %v826, 2147483648
  %v830 = vmul.f32 %v829, 1.442695
  %v831 = vpow.pop %v830
  %v832 = vadd.f32 %v831, 1.0
  %v833 = vrcp.pop %v832
  %v834 = vmul.f32 1.0, %v833
  %vm835 = vcmask 1024
  %836 = vst.msk [vmem:[%s8] sm:$0x3] %vm835, %v834
  // Predicated region
  $region34: #{forward.1} parent=0 // pred_check
    _
  $region35: #{forward.1} parent=0 // pred_check_branch
    %838 = sbr.rel (0) target = $region37
  $region36: #{forward.1} parent=0 // pred_region
    _
  $region37: #{forward.1} parent=0 // pred_fallthru
    _
  // Predicated region
  $region38: #{forward.1} parent=0 // pred_check
    _
  $region39: #{forward.1} parent=0 // pred_check_branch
    %840 = sbr.rel (0) target = $region41
  $region40: #{forward.1} parent=0 // pred_region
    _
  $region41: #{forward.1} parent=0 // pred_fallthru
    _

</llo_original>
